<compile_context>
chip_gen: v7x
topology: tpu7x:2x2x1
jax: 0.10.0
libtpu: 0.0.40
codegen_flags: <defaults>
</compile_context>

<pallas_src>
import math
import numpy as np

import jax
import jax.numpy as jnp
from jax.experimental import pallas as pl
from jax.experimental.pallas import tpu as pltpu


def to_2tuple(v):
    return tuple(v) if isinstance(v, (tuple, list)) else (v, v)


# ----------------------------------------------------------------------------
# Glue: 1-D bicubic resize operator (depends only on sizes, not on data).
# Matches torch.nn.functional.interpolate(mode="bicubic", align_corners=False)
# with a = -0.75 and edge-clamped source indices (antialias=False).
# ----------------------------------------------------------------------------
def _cubic(x, a=-0.75):
    x = abs(x)
    if x <= 1.0:
        return ((a + 2.0) * x - (a + 3.0)) * x * x + 1.0
    if x < 2.0:
        return (((x - 5.0) * x + 8.0) * x - 4.0) * a
    return 0.0


def _bicubic_resize_matrix(old, new):
    """(new, old) matrix R s.t. (R @ v) == 1-D bicubic resize of v (align_corners=False)."""
    if old == new:
        return np.eye(new, dtype=np.float64)
    R = np.zeros((new, old), dtype=np.float64)
    scale = old / new
    for i in range(new):
        s = (i + 0.5) * scale - 0.5
        f = math.floor(s)
        t = s - f
        for k, w in zip(
            (f - 1, f, f + 1, f + 2),
            (_cubic(t + 1.0), _cubic(t), _cubic(1.0 - t), _cubic(2.0 - t)),
        ):
            R[i, min(max(k, 0), old - 1)] += w
    return R


# ----------------------------------------------------------------------------
# Pallas kernel: broadcast add of the precomputed positional buffer onto x.
#   x_ref   : (TB, TC)  batch-tile x token-chunk of the flattened input
#   pos_ref : (1,  TC)  matching chunk of the flattened positional buffer
#   o_ref   : (TB, TC)
# The flattened last axis is lane-dense, so stores are (mostly) unmasked even
# when the embedding dim is < 128.
# ----------------------------------------------------------------------------
def _add_pos_kernel(x_ref, pos_ref, o_ref):
    o_ref[...] = x_ref[...] + pos_ref[...]


_LANE = 128
_SUBLANE = 8
_MIN_CHUNK = _SUBLANE * _LANE  # 1024 elements


def _vmem_policy():
    """Return (tile budget bytes, vmem_limit_bytes) per TPU generation."""
    try:
        cap = pltpu.get_tpu_info().vmem_capacity_bytes
    except Exception:
        cap = None
    if cap is not None and cap >= (100 << 20):      # v5e / v6e: 128 MiB physical VMEM
        return 64 << 20, 96 << 20
    return 24 << 20, 32 << 20                       # v7x-safe (64 MiB VMEM, 32 MiB scoped)


def _tile_vmem_bytes(tb, tc, itemsize):
    # double-buffered x-in + out blocks, plus double-buffered pos block
    return 2 * (2 * tb + 1) * tc * itemsize


def _round_up(v, m):
    return ((v + m - 1) // m) * m


def _choose_tiles(B, T, itemsize, budget_bytes, split_threshold_bytes=256 << 10):
    """Pick (tb, tc): batch tile and flattened-token chunk.

    Layout legality: tc is the full extent T or a multiple of 128 (lanes);
    tb is the full extent B or a multiple of 8 (sublanes).  Ragged trailing
    blocks are left to the pl.cdiv grid (masked by Pallas)."""
    tb_floor = B if B < _SUBLANE else _SUBLANE

    # --- chunk along the flattened lane-dense axis ---
    if _tile_vmem_bytes(tb_floor, T, itemsize) <= budget_bytes:
        tc = T                                           # full extent: always legal
    else:
        tc = budget_bytes // (2 * (2 * tb_floor + 1) * itemsize)
        tc = max(_MIN_CHUNK, (tc // _MIN_CHUNK) * _MIN_CHUNK)
        tc = min(tc, T)

    # --- batch tile (grow within budget; multiple of 8 unless it covers B) ---
    max_tb = max(1, (budget_bytes // (2 * tc * itemsize) - 1) // 2)
    if max_tb >= B:
        tb = B
    else:
        tb = max(_SUBLANE, (max_tb // _SUBLANE) * _SUBLANE)

    # --- ensure >=2 grid steps when the work is big enough (feeds both v7x TCs) ---
    n_steps = pl.cdiv(B, tb) * pl.cdiv(T, tc)
    if n_steps == 1 and B * T * itemsize >= split_threshold_bytes:
        if T >= 2 * _MIN_CHUNK:
            tc = _round_up(pl.cdiv(T, 2), _MIN_CHUNK)
        elif B >= 2 * _SUBLANE:
            tb = _round_up(pl.cdiv(B, 2), _SUBLANE)
    return tb, tc


def flexi_pos_embed_add(x, pos_full):
    """x: (B, N, D); pos_full: (N, D). Returns x + pos_full[None] via Pallas.

    The trailing (N, D) dims are flattened into a single lane-dense axis so the
    kernel's loads/stores are unmasked even when D is not a multiple of 128."""
    B, N, D = x.shape
    assert pos_full.shape == (N, D), (pos_full.shape, (N, D))
    T = N * D
    itemsize = jnp.dtype(x.dtype).itemsize

    x2 = x.reshape(B, T)                                 # free metadata reshape
    pos2 = pos_full.astype(x.dtype).reshape(1, T)        # pre-cast once

    budget, vmem_limit = _vmem_policy()
    tb, tc = _choose_tiles(B, T, itemsize, budget)
    # chunk-major / batch-minor grid: the pos chunk index is constant across the
    # inner batch loop, so Pallas DMAs each pos chunk only once.
    grid = (pl.cdiv(T, tc), pl.cdiv(B, tb))

    out = pl.pallas_call(
        _add_pos_kernel,
        out_shape=jax.ShapeDtypeStruct((B, T), x.dtype),
        grid=grid,
        in_specs=[
            pl.BlockSpec((tb, tc), lambda c, b: (b, c)),
            pl.BlockSpec((1, tc), lambda c, b: (0, c)),
        ],
        out_specs=pl.BlockSpec((tb, tc), lambda c, b: (b, c)),
        # NOTE: no input_output_aliases — x stays live at this call site, so an
        # alias would only add a defensive copy.  Donate x at the jit boundary
        # for a true in-place update.
        compiler_params=pltpu.CompilerParams(
            dimension_semantics=("parallel", "parallel"),
            vmem_limit_bytes=vmem_limit,
        ),
    )(x2, pos2)
    return out.reshape(B, N, D)


_flexi_pos_embed_add_jit = jax.jit(flexi_pos_embed_add)


# ----------------------------------------------------------------------------
# Module wrapper (parameter setup + shape arithmetic + memoized one-off
# resample = glue; the per-batch broadcast add = Pallas kernel)
# ----------------------------------------------------------------------------
class FlexiPosEmbedPallas:
    def __init__(
        self,
        input_size=(32, 32),
        pos_grid_size=(4, 4),
        embed_dim=32,
        n_prefix_tokens=1,
        pos_embed_prefix=True,
        key=None,
    ):
        self.input_size = to_2tuple(input_size)
        self.pos_grid_size = to_2tuple(pos_grid_size)
        self.embed_dim = embed_dim
        self.n_prefix_tokens = n_prefix_tokens
        self.pos_embed_prefix = pos_embed_prefix
        num_patches = self.pos_grid_size[0] * self.pos_grid_size[1]
        pos_embed_shape = (
            1,
            num_patches + (n_prefix_tokens if pos_embed_prefix else 0),
            embed_dim,
        )
        # Deterministic init, matching torch.randn(...) * 0.02 semantics.
        key = jax.random.PRNGKey(0) if key is None else key
        self.pos_embed = 0.02 * jax.random.normal(key, pos_embed_shape, dtype=jnp.float32)
        self._pos_cache = {}   # patch_size -> (N, D) positional buffer

    @staticmethod
    def get_shape(fstride, tstride, patch_size, input_fdim, input_tdim):
        # nn.Conv2d(1, 1, kernel_size=patch, stride=(fstride, tstride)), no padding:
        ph, pw = to_2tuple(patch_size)
        f_dim = (input_fdim - ph) // fstride + 1
        t_dim = (input_tdim - pw) // tstride + 1
        return (f_dim, t_dim)

    def _pos_buffer(self, patch_size):
        """Full (N, D) positional buffer: prefix rows ++ bicubic-resampled spatial
        rows.  Batch-invariant -> computed once per patch_size (memoized) in plain
        XLA (separable contractions; no kron operator, no per-batch MXU work)."""
        patch_size = to_2tuple(patch_size)
        cached = self._pos_cache.get(patch_size)
        if cached is not None:
            return cached

        ph, pw = patch_size
        new_h, new_w = FlexiPosEmbedPallas.get_shape(ph, pw, (ph, pw), *self.input_size)
        old_h, old_w = self.pos_grid_size

        if self.pos_embed_prefix:
            prefix = self.pos_embed[0, : self.n_prefix_tokens]       # (n_prefix, D)
            spatial = self.pos_embed[0, self.n_prefix_tokens:]       # (old_N, D)
        else:
            # pos_embed has no prefix rows; prefix tokens of x pass through unchanged.
            prefix = jnp.zeros((self.n_prefix_tokens, self.embed_dim), jnp.float32)
            spatial = self.pos_embed[0]                              # (old_N, D)

        if (new_h, new_w) == (old_h, old_w):
            resampled = spatial
        else:
            W_h = jnp.asarray(_bicubic_resize_matrix(old_h, new_h), jnp.float32)  # (new_h, old_h)
            W_w = jnp.asarray(_bicubic_resize_matrix(old_w, new_w), jnp.float32)  # (new_w, old_w)
            grid = spatial.reshape(old_h, old_w, self.embed_dim)
            t = jnp.einsum("Ww,hwd->hWd", W_w, grid)                 # resize width
            t = jnp.einsum("Hh,hWd->HWd", W_h, t)                    # resize height
            resampled = t.reshape(new_h * new_w, self.embed_dim)

        pos_full = jnp.concatenate([prefix, resampled], axis=0)      # (N, D)
        self._pos_cache[patch_size] = pos_full
        return pos_full

    def __call__(self, x, patch_size):
        return _flexi_pos_embed_add_jit(x, self._pos_buffer(patch_size))

    # Pure-JAX reference (for correctness checking only).
    def reference(self, x, patch_size):
        pos_full = self._pos_buffer(patch_size)
        return x + pos_full.astype(x.dtype)[None, :, :]


if __name__ == "__main__":
    # Small, self-consistent shapes:
    #   input spectrogram 32x32, pos grid 4x4, forward patch_size=4
    #   -> new grid 8x8 -> 64 patch tokens + 1 prefix token = 65 tokens.
    B, D = 2, 32
    input_size = (32, 32)
    pos_grid_size = (4, 4)
    n_prefix = 1
    patch_size = 4

    root = jax.random.PRNGKey(0)
    k_pos, k_x = jax.random.split(root)

    module = FlexiPosEmbedPallas(
        input_size=input_size,
        pos_grid_size=pos_grid_size,
        embed_dim=D,
        n_prefix_tokens=n_prefix,
        pos_embed_prefix=True,
        key=k_pos,
    )

    new_h = (input_size[0] - patch_size) // patch_size + 1
    new_w = (input_size[1] - patch_size) // patch_size + 1
    N = n_prefix + new_h * new_w  # 1 + 64 = 65

    x = jax.random.normal(k_x, (B, N, D), dtype=jnp.float32)

    out = jax.block_until_ready(module(x, patch_size))
    ref = jax.block_until_ready(module.reference(x, patch_size))

    assert out.shape == (B, N, D), out.shape
    assert np.allclose(np.asarray(out), np.asarray(ref), atol=1e-5, rtol=1e-5)

    print("KERNEL_OK")
</pallas_src>

<mosaic_0001>
module attributes {stable_mosaic.version = 11 : i64} {
  func.func @_add_pos_kernel(%arg0: i32, %arg1: i32, %arg2: memref<2x2080xf32, #tpu.memory_space<vmem>>, %arg3: memref<1x2080xf32, #tpu.memory_space<vmem>>, %arg4: memref<2x2080xf32, #tpu.memory_space<vmem>>) attributes {dimension_semantics = [#tpu.dimension_semantics<parallel>, #tpu.dimension_semantics<parallel>], iteration_bounds = array<i64: 1, 1>, scalar_prefetch = 0 : i64, scratch_operands = 0 : i64, tpu.core_type = #tpu.core_type<tc>, window_params = [{transform_indices = @transform_0, window_bounds = array<i64: 2, 2080>}, {transform_indices = @transform_1, window_bounds = array<i64: 1, 2080>}, {transform_indices = @transform_2, window_bounds = array<i64: 2, 2080>}]} {
    %c0 = arith.constant 0 : index
    %c0_0 = arith.constant 0 : index
    %0 = vector.load %arg2[%c0, %c0_0] : memref<2x2080xf32, #tpu.memory_space<vmem>>, vector<2x2080xf32>
    %c0_1 = arith.constant 0 : index
    %c0_2 = arith.constant 0 : index
    %1 = vector.load %arg3[%c0_1, %c0_2] : memref<1x2080xf32, #tpu.memory_space<vmem>>, vector<1x2080xf32>
    %2 = vector.broadcast %1 : vector<1x2080xf32> to vector<2x2080xf32>
    %3 = arith.addf %0, %2 : vector<2x2080xf32>
    %c0_3 = arith.constant 0 : index
    %c0_4 = arith.constant 0 : index
    %4 = vector.load %arg4[%c0_3, %c0_4] : memref<2x2080xf32, #tpu.memory_space<vmem>>, vector<2x2080xf32>
    tpu.vector_store %arg4[%c0_3, %c0_4], %3 {strides = array<i32>} : memref<2x2080xf32, #tpu.memory_space<vmem>>, vector<2x2080xf32>,
    return
  }
  func.func @transform_0(%arg0: i32, %arg1: i32) -> (i32, i32) {
    %c0_i32 = arith.constant 0 : i32
    return %arg1, %arg0 : i32, i32
  }
  func.func @transform_1(%arg0: i32, %arg1: i32) -> (i32, i32) {
    %c0_i32 = arith.constant 0 : i32
    %c0_i32_0 = arith.constant 0 : i32
    return %c0_i32, %arg0 : i32, i32
  }
  func.func @transform_2(%arg0: i32, %arg1: i32) -> (i32, i32) {
    %c0_i32 = arith.constant 0 : i32
    return %arg1, %arg0 : i32, i32
  }
}

</mosaic_0001>

<llo_original>
// kernel: flexi_pos_embed_add.1
$region0: #{flexi_pos_embed_add.1}
  #allocation0 [shape = 'u32[]', space=smem, size = 0x4, offset = 0x4, fixed_abs, tag = 'smem constant byte address 0x4 - core index']
  #allocation1 [shape = 'u32[144,128]{1,0:T(1,128)}', space=vmem, size = 0x12000, scoped, tag = 'internal scratch']
  %s0 = inlined_call_operand.vmem [shape: f32[2,2080], index: 0, kind: input, shape index: {}]
  %s1 = inlined_call_operand.vmem [shape: f32[1,2080], index: 1, kind: input, shape index: {}]
  %s2 = inlined_call_operand.vmem [shape: f32[2,2080], index: 2, kind: output, shape index: {}]
  %s3 = sld [smem:[#allocation0]]
  $region18: #{flexi_pos_embed_add.1} parent=0
    _
  %s5 = ssub.s32 1, %s3
  %s6 = scalar_select 0, %s5, %s3
  // Predicated region
  $region2: #{flexi_pos_embed_add.1} parent=0 // pred_check
    _
  $region3: #{flexi_pos_embed_add.1} parent=0 // pred_check_branch
    %8 = sbr.rel (0) target = $region5
  $region4: #{flexi_pos_embed_add.1} parent=0 // pred_region
    _
  $region5: #{flexi_pos_embed_add.1} parent=0 // pred_fallthru
    _
  // Predicated region
  $region6: #{flexi_pos_embed_add.1} parent=0 // pred_check
    _
  $region7: #{flexi_pos_embed_add.1} parent=0 // pred_check_branch
    %10 = sbr.rel (0) target = $region9
  $region8: #{flexi_pos_embed_add.1} parent=0 // pred_region
    _
  $region9: #{flexi_pos_embed_add.1} parent=0 // pred_fallthru
    _
  %v11 = vld [vmem:[%s0] sm:$0xff]
  %v12 = vld [vmem:[%s0 + $0x8] sm:$0xff]
  %v13 = vld [vmem:[%s0 + $0x10] sm:$0xff]
  %v14 = vld [vmem:[%s0 + $0x18] sm:$0xff]
  %v15 = vld [vmem:[%s0 + $0x20] sm:$0x3]
  %v16 = vld [vmem:[%s1] sm:$0xff]
  %v17 = vld [vmem:[%s1 + $0x8] sm:$0xff]
  %v18 = vld [vmem:[%s1 + $0x10] sm:$0x1]
  %v22 = vlaneseq
  %v23 = vshrl.u32 %v22, 7
  %v24 = vsub.s32 0, %v23
  %v25 = vrot.slane %v16, %v24
  %v26 = vlaneseq
  %v27 = vshrl.u32 %v26, 7
  %v28 = vsub.s32 1, %v27
  %v29 = vrot.slane %v16, %v28
  %v30 = vlaneseq
  %v31 = vshrl.u32 %v30, 7
  %v32 = vsub.s32 2, %v31
  %v33 = vrot.slane %v16, %v32
  %v34 = vlaneseq
  %v35 = vshrl.u32 %v34, 7
  %v36 = vsub.s32 3, %v35
  %v37 = vrot.slane %v16, %v36
  %v38 = vlaneseq
  %v39 = vshrl.u32 %v38, 7
  %v40 = vsub.s32 4, %v39
  %v41 = vrot.slane %v16, %v40
  %v42 = vlaneseq
  %v43 = vshrl.u32 %v42, 7
  %v44 = vsub.s32 5, %v43
  %v45 = vrot.slane %v16, %v44
  %v46 = vlaneseq
  %v47 = vshrl.u32 %v46, 7
  %v48 = vsub.s32 6, %v47
  %v49 = vrot.slane %v16, %v48
  %v50 = vlaneseq
  %v51 = vshrl.u32 %v50, 7
  %v52 = vsub.s32 7, %v51
  %v53 = vrot.slane %v16, %v52
  %v54 = vlaneseq
  %v55 = vshrl.u32 %v54, 7
  %v56 = vsub.s32 0, %v55
  %v57 = vrot.slane %v17, %v56
  %v58 = vlaneseq
  %v59 = vshrl.u32 %v58, 7
  %v60 = vsub.s32 1, %v59
  %v61 = vrot.slane %v17, %v60
  %v62 = vlaneseq
  %v63 = vshrl.u32 %v62, 7
  %v64 = vsub.s32 2, %v63
  %v65 = vrot.slane %v17, %v64
  %v66 = vlaneseq
  %v67 = vshrl.u32 %v66, 7
  %v68 = vsub.s32 3, %v67
  %v69 = vrot.slane %v17, %v68
  %v70 = vlaneseq
  %v71 = vshrl.u32 %v70, 7
  %v72 = vsub.s32 4, %v71
  %v73 = vrot.slane %v17, %v72
  %v74 = vlaneseq
  %v75 = vshrl.u32 %v74, 7
  %v76 = vsub.s32 5, %v75
  %v77 = vrot.slane %v17, %v76
  %v78 = vlaneseq
  %v79 = vshrl.u32 %v78, 7
  %v80 = vsub.s32 6, %v79
  %v81 = vrot.slane %v17, %v80
  %v82 = vlaneseq
  %v83 = vshrl.u32 %v82, 7
  %v84 = vsub.s32 7, %v83
  %v85 = vrot.slane %v17, %v84
  %v86 = vlaneseq
  %v87 = vshrl.u32 %v86, 7
  %v88 = vsub.s32 0, %v87
  %v89 = vrot.slane %v18, %v88
  %v90 = vcombine.low %v25, %v29
  %v91 = vcombine.low %v33, %v37
  %v93 = vunpack.c.l.s4 1983009808
  %v94 = vunpack.c.0.s8 %v93
  %v95 = vlaneseq
  %v96 = vshrl.u32 %v95, 7
  %v97 = vsub.s32 %v94, %v96
  %v98 = vrot.slane %v90, %v97
  %v100 = vunpack.c.l.s4 1983009808
  %v101 = vunpack.c.0.s8 %v100
  %v102 = vlaneseq
  %v103 = vshrl.u32 %v102, 7
  %v104 = vsub.s32 %v101, %v103
  %v105 = vrot.slane %v91, %v104
  %v106 = vcombine.low %v98, %v105
  %v107 = vcombine.low %v41, %v45
  %v108 = vcombine.low %v49, %v53
  %v110 = vunpack.c.l.s4 1983009808
  %v111 = vunpack.c.0.s8 %v110
  %v112 = vlaneseq
  %v113 = vshrl.u32 %v112, 7
  %v114 = vsub.s32 %v111, %v113
  %v115 = vrot.slane %v107, %v114
  %v117 = vunpack.c.l.s4 1983009808
  %v118 = vunpack.c.0.s8 %v117
  %v119 = vlaneseq
  %v120 = vshrl.u32 %v119, 7
  %v121 = vsub.s32 %v118, %v120
  %v122 = vrot.slane %v108, %v121
  %v123 = vcombine.low %v115, %v122
  %v124 = vcombine.low %v57, %v61
  %v125 = vcombine.low %v65, %v69
  %v127 = vunpack.c.l.s4 1983009808
  %v128 = vunpack.c.0.s8 %v127
  %v129 = vlaneseq
  %v130 = vshrl.u32 %v129, 7
  %v131 = vsub.s32 %v128, %v130
  %v132 = vrot.slane %v124, %v131
  %v134 = vunpack.c.l.s4 1983009808
  %v135 = vunpack.c.0.s8 %v134
  %v136 = vlaneseq
  %v137 = vshrl.u32 %v136, 7
  %v138 = vsub.s32 %v135, %v137
  %v139 = vrot.slane %v125, %v138
  %v140 = vcombine.low %v132, %v139
  %v141 = vcombine.low %v73, %v77
  %v142 = vcombine.low %v81, %v85
  %v144 = vunpack.c.l.s4 1983009808
  %v145 = vunpack.c.0.s8 %v144
  %v146 = vlaneseq
  %v147 = vshrl.u32 %v146, 7
  %v148 = vsub.s32 %v145, %v147
  %v149 = vrot.slane %v141, %v148
  %v151 = vunpack.c.l.s4 1983009808
  %v152 = vunpack.c.0.s8 %v151
  %v153 = vlaneseq
  %v154 = vshrl.u32 %v153, 7
  %v155 = vsub.s32 %v152, %v154
  %v156 = vrot.slane %v142, %v155
  %v157 = vcombine.low %v149, %v156
  %v159 = vunpack.c.l.s4 1983009808
  %v160 = vunpack.c.0.s8 %v159
  %v161 = vlaneseq
  %v162 = vshrl.u32 %v161, 7
  %v163 = vsub.s32 %v160, %v162
  %v164 = vrot.slane %v89, %v163
  %v170 = vadd.f32 %v11, %v106
  %v171 = vadd.f32 %v12, %v123
  %v172 = vadd.f32 %v13, %v140
  %v173 = vadd.f32 %v14, %v157
  %v174 = vadd.f32 %v15, %v164
  %175 = vst [vmem:[%s2] sm:$0xff] %v170
  %176 = vst [vmem:[%s2 + $0x8] sm:$0xff] %v171
  %177 = vst [vmem:[%s2 + $0x10] sm:$0xff] %v172
  %178 = vst [vmem:[%s2 + $0x18] sm:$0xff] %v173
  %vm179 = vcmask 254976
  %180 = vst.msk [vmem:[%s2 + $0x20] sm:$0x3] %vm179, %v174
  // Predicated region
  $region10: #{flexi_pos_embed_add.1} parent=0 // pred_check
    _
  $region11: #{flexi_pos_embed_add.1} parent=0 // pred_check_branch
    %182 = sbr.rel (0) target = $region13
  $region12: #{flexi_pos_embed_add.1} parent=0 // pred_region
    _
  $region13: #{flexi_pos_embed_add.1} parent=0 // pred_fallthru
    _
  // Predicated region
  $region14: #{flexi_pos_embed_add.1} parent=0 // pred_check
    _
  $region15: #{flexi_pos_embed_add.1} parent=0 // pred_check_branch
    %184 = sbr.rel (0) target = $region17
  $region16: #{flexi_pos_embed_add.1} parent=0 // pred_region
    _
  $region17: #{flexi_pos_embed_add.1} parent=0 // pred_fallthru
    _

</llo_original>
